<compile_context>
chip_gen: v5e
topology: v5e:2x2
jax: 0.10.0
libtpu: 0.0.40
codegen_flags: <defaults>
</compile_context>

<pallas_src>
import functools

import jax
import jax.numpy as jnp
from jax.experimental import pallas as pl
from jax.experimental.pallas import tpu as pltpu


def _decoder_kernel(x_ref, w1t_ref, w2t_ref, w3t_ref, b_ref, o_ref, *,
                    h1, h2, compute_dtype):
    """One batch tile of the fused MLP, batch-major.

    x_ref   : (TB, E)        input rows in natural layout (f32)
    wKt_ref : (inK, outK)    weights pre-transposed to (in, out), VMEM-resident
    b_ref   : (1, h1+h2+OUT) f32 packed biases
    o_ref   : (TB, OUT)      output rows
    """
    x = x_ref[...].astype(compute_dtype)

    b1 = b_ref[:, 0:h1]
    b2 = b_ref[:, h1:h1 + h2]
    b3 = b_ref[:, h1 + h2:]

    # Layer 1: (TB, E) @ (E, H1) -> (TB, H1); f32 accumulation, SiLU in f32.
    a1 = jnp.dot(x, w1t_ref[...], preferred_element_type=jnp.float32) + b1
    a1 = a1 * jax.nn.sigmoid(a1)

    # Layer 2: (TB, H1) @ (H1, H2) -> (TB, H2)
    a2 = jnp.dot(a1.astype(compute_dtype), w2t_ref[...],
                 preferred_element_type=jnp.float32) + b2
    a2 = a2 * jax.nn.sigmoid(a2)

    # Layer 3: (TB, H2) @ (H2, OUT) -> (TB, OUT)
    out = jnp.dot(a2.astype(compute_dtype), w3t_ref[...],
                  preferred_element_type=jnp.float32) + b3

    o_ref[...] = out.astype(o_ref.dtype)


def _round_up(a, m):
    return (a + m - 1) // m * m


def decoder_forward(x, params, *, tile_b=8192, use_bf16=True, out_dtype=None):
    """x: (B, encode_size) float32.  params: w1,b1,w2,b2,w3,b3 in PyTorch (out, in) layout.

    Returns (B, output_size).  Set out_dtype=jnp.bfloat16 if the consumer
    tolerates it (halves the output HBM write); defaults to x.dtype.
    """
    w1, b1, w2, b2, w3, b3 = (
        params["w1"], params["b1"], params["w2"],
        params["b2"], params["w3"], params["b3"],
    )
    B, E = x.shape
    H1 = w1.shape[0]
    H2 = w2.shape[0]
    OUT = w3.shape[0]
    out_dtype = x.dtype if out_dtype is None else out_dtype

    # Batch tile: multiple of 8 (sublane constraint).  No padding of x itself:
    # the last grid step is a partial block and Pallas masks the OOB rows.
    tile_b = _round_up(max(tile_b, 8), 8)
    tb = min(tile_b, _round_up(B, 8))
    grid = (pl.cdiv(B, tb),)

    comp_dtype = jnp.bfloat16 if use_bf16 else jnp.float32

    # Tiny, one-time XLA ops (weights only): pre-transpose to (in, out), cast,
    # and pack the biases into a single buffer -> one DMA instead of three.
    w1t = w1.T.astype(comp_dtype)
    w2t = w2.T.astype(comp_dtype)
    w3t = w3.T.astype(comp_dtype)
    bias = jnp.concatenate(
        [b1.reshape(-1), b2.reshape(-1), b3.reshape(-1)]
    ).reshape(1, -1).astype(jnp.float32)

    kernel = functools.partial(_decoder_kernel, h1=H1, h2=H2,
                               compute_dtype=comp_dtype)

    return pl.pallas_call(
        kernel,
        out_shape=jax.ShapeDtypeStruct((B, OUT), out_dtype),
        grid=grid,
        in_specs=[
            pl.BlockSpec((tb, E), lambda i: (i, 0)),        # x rows: pipelined over batch
            pl.BlockSpec(w1t.shape, lambda i: (0, 0)),      # weights: VMEM-resident
            pl.BlockSpec(w2t.shape, lambda i: (0, 0)),
            pl.BlockSpec(w3t.shape, lambda i: (0, 0)),
            pl.BlockSpec(bias.shape, lambda i: (0, 0)),     # packed biases: one DMA
        ],
        out_specs=pl.BlockSpec((tb, OUT), lambda i: (i, 0)),
        compiler_params=pltpu.CompilerParams(
            dimension_semantics=("parallel",),              # megacore on v7x
            vmem_limit_bytes=48 * 1024 * 1024,              # room for tb=8192 tiles on all gens
        ),
    )(x, w1t, w2t, w3t, bias)


def init_params(key, encode_size=32, output_size=16):
    """Deterministic init mimicking nn.Linear defaults (uniform +/- 1/sqrt(fan_in)).

    Weights stored in PyTorch (out_features, in_features) layout.
    """
    def linear(k, fan_in, fan_out):
        k_w, k_b = jax.random.split(k)
        bound = 1.0 / jnp.sqrt(fan_in)
        w = jax.random.uniform(k_w, (fan_out, fan_in), jnp.float32, -bound, bound)
        b = jax.random.uniform(k_b, (fan_out,), jnp.float32, -bound, bound)
        return w, b

    k1, k2, k3 = jax.random.split(key, 3)
    w1, b1 = linear(k1, encode_size, 32)
    w2, b2 = linear(k2, 32, 64)
    w3, b3 = linear(k3, 64, output_size)
    return {"w1": w1, "b1": b1, "w2": w2, "b2": b2, "w3": w3, "b3": b3}


def decoder_ref(x, p):
    """Pure-JAX f32 reference (matches the PyTorch module)."""
    silu = lambda v: v * jax.nn.sigmoid(v)
    h1 = silu(x @ p["w1"].T + p["b1"])
    h2 = silu(h1 @ p["w2"].T + p["b2"])
    return h2 @ p["w3"].T + p["b3"]


if __name__ == "__main__":
    key = jax.random.PRNGKey(0)
    k_params, k_x, k_x2 = jax.random.split(key, 3)

    encode_size = 32
    output_size = 16

    params = init_params(k_params, encode_size=encode_size, output_size=output_size)

    # Small batch (production-like, single partial tile).
    x = jax.random.normal(k_x, (8, encode_size), jnp.float32)
    ref = decoder_ref(x, params)

    out_f32 = jax.block_until_ready(decoder_forward(x, params, use_bf16=False))
    assert out_f32.shape == (8, output_size), out_f32.shape
    assert jnp.allclose(out_f32, ref, atol=1e-5, rtol=1e-5), float(
        jnp.max(jnp.abs(out_f32 - ref)))

    out_bf16 = jax.block_until_ready(decoder_forward(x, params, use_bf16=True))
    assert out_bf16.shape == (8, output_size), out_bf16.shape
    assert jnp.allclose(out_bf16, ref, atol=5e-2, rtol=5e-2), float(
        jnp.max(jnp.abs(out_bf16 - ref)))

    # Ragged batch: exercises the partial last block (no wrapper padding pass).
    x2 = jax.random.normal(k_x2, (300, encode_size), jnp.float32)
    ref2 = decoder_ref(x2, params)
    out2 = jax.block_until_ready(
        decoder_forward(x2, params, use_bf16=False, tile_b=256))
    assert out2.shape == (300, output_size), out2.shape
    assert jnp.allclose(out2, ref2, atol=1e-5, rtol=1e-5), float(
        jnp.max(jnp.abs(out2 - ref2)))

    print("KERNEL_OK")
</pallas_src>

<mosaic_0001>
module attributes {stable_mosaic.version = 11 : i64} {
  func.func @_decoder_kernel(%arg0: i32, %arg1: memref<8x32xf32, #tpu.memory_space<vmem>>, %arg2: memref<32x32xf32, #tpu.memory_space<vmem>>, %arg3: memref<32x64xf32, #tpu.memory_space<vmem>>, %arg4: memref<64x16xf32, #tpu.memory_space<vmem>>, %arg5: memref<1x112xf32, #tpu.memory_space<vmem>>, %arg6: memref<8x16xf32, #tpu.memory_space<vmem>>) attributes {dimension_semantics = [#tpu.dimension_semantics<parallel>], iteration_bounds = array<i64: 1>, scalar_prefetch = 0 : i64, scratch_operands = 0 : i64, tpu.core_type = #tpu.core_type<tc>, window_params = [{transform_indices = @transform_0, window_bounds = array<i64: 8, 32>}, {pipeline_mode = #tpu.pipeline_mode<synchronous>, transform_indices = @transform_1, window_bounds = array<i64: 32, 32>}, {pipeline_mode = #tpu.pipeline_mode<synchronous>, transform_indices = @transform_2, window_bounds = array<i64: 32, 64>}, {pipeline_mode = #tpu.pipeline_mode<synchronous>, transform_indices = @transform_3, window_bounds = array<i64: 64, 16>}, {pipeline_mode = #tpu.pipeline_mode<synchronous>, transform_indices = @transform_4, window_bounds = array<i64: 1, 112>}, {transform_indices = @transform_5, window_bounds = array<i64: 8, 16>}]} {
    %c0 = arith.constant 0 : index
    %c0_0 = arith.constant 0 : index
    %0 = vector.load %arg1[%c0, %c0_0] : memref<8x32xf32, #tpu.memory_space<vmem>>, vector<8x32xf32>
    %c0_1 = arith.constant 0 : index
    %c0_2 = arith.constant 0 : index
    %1 = vector.load %arg5[%c0_1, %c0_2] : memref<1x112xf32, #tpu.memory_space<vmem>>, vector<1x32xf32>
    %c0_3 = arith.constant 0 : index
    %c32 = arith.constant 32 : index
    %2 = vector.load %arg5[%c0_3, %c32] : memref<1x112xf32, #tpu.memory_space<vmem>>, vector<1x64xf32>
    %c0_4 = arith.constant 0 : index
    %c96 = arith.constant 96 : index
    %3 = vector.load %arg5[%c0_4, %c96] : memref<1x112xf32, #tpu.memory_space<vmem>>, vector<1x16xf32>
    %c0_5 = arith.constant 0 : index
    %c0_6 = arith.constant 0 : index
    %4 = vector.load %arg2[%c0_5, %c0_6] : memref<32x32xf32, #tpu.memory_space<vmem>>, vector<32x32xf32>
    %cst = arith.constant dense<0.000000e+00> : vector<8x32xf32>
    %5 = tpu.matmul %0, %4, %cst {dimension_numbers = #tpu.dot_dimension_numbers<[1], [0], [0], [1], [0, 0, 1, 1], [], []>} : vector<8x32xf32>, vector<32x32xf32>, vector<8x32xf32> -> vector<8x32xf32>
    %6 = vector.broadcast %1 : vector<1x32xf32> to vector<8x32xf32>
    %7 = arith.addf %5, %6 : vector<8x32xf32>
    %8 = arith.negf %7 : vector<8x32xf32>
    %9 = math.exp %8 : vector<8x32xf32>
    %cst_7 = arith.constant 1.000000e+00 : f32
    %10 = vector.broadcast %cst_7 : f32 to vector<8x32xf32>
    %11 = arith.addf %10, %9 : vector<8x32xf32>
    %12 = arith.divf %10, %11 : vector<8x32xf32>
    %13 = arith.mulf %7, %12 : vector<8x32xf32>
    %c0_8 = arith.constant 0 : index
    %c0_9 = arith.constant 0 : index
    %14 = vector.load %arg3[%c0_8, %c0_9] : memref<32x64xf32, #tpu.memory_space<vmem>>, vector<32x64xf32>
    %cst_10 = arith.constant dense<0.000000e+00> : vector<8x64xf32>
    %15 = tpu.matmul %13, %14, %cst_10 {dimension_numbers = #tpu.dot_dimension_numbers<[1], [0], [0], [1], [0, 0, 1, 1], [], []>} : vector<8x32xf32>, vector<32x64xf32>, vector<8x64xf32> -> vector<8x64xf32>
    %16 = vector.broadcast %2 : vector<1x64xf32> to vector<8x64xf32>
    %17 = arith.addf %15, %16 : vector<8x64xf32>
    %18 = arith.negf %17 : vector<8x64xf32>
    %19 = math.exp %18 : vector<8x64xf32>
    %cst_11 = arith.constant 1.000000e+00 : f32
    %20 = vector.broadcast %cst_11 : f32 to vector<8x64xf32>
    %21 = arith.addf %20, %19 : vector<8x64xf32>
    %22 = arith.divf %20, %21 : vector<8x64xf32>
    %23 = arith.mulf %17, %22 : vector<8x64xf32>
    %c0_12 = arith.constant 0 : index
    %c0_13 = arith.constant 0 : index
    %24 = vector.load %arg4[%c0_12, %c0_13] : memref<64x16xf32, #tpu.memory_space<vmem>>, vector<64x16xf32>
    %cst_14 = arith.constant dense<0.000000e+00> : vector<8x16xf32>
    %25 = tpu.matmul %23, %24, %cst_14 {dimension_numbers = #tpu.dot_dimension_numbers<[1], [0], [0], [1], [0, 0, 1, 1], [], []>} : vector<8x64xf32>, vector<64x16xf32>, vector<8x16xf32> -> vector<8x16xf32>
    %26 = vector.broadcast %3 : vector<1x16xf32> to vector<8x16xf32>
    %27 = arith.addf %25, %26 : vector<8x16xf32>
    %c0_15 = arith.constant 0 : index
    %c0_16 = arith.constant 0 : index
    %28 = vector.load %arg6[%c0_15, %c0_16] : memref<8x16xf32, #tpu.memory_space<vmem>>, vector<8x16xf32>
    tpu.vector_store %arg6[%c0_15, %c0_16], %27 {strides = array<i32>} : memref<8x16xf32, #tpu.memory_space<vmem>>, vector<8x16xf32>,
    return
  }
  func.func @transform_0(%arg0: i32) -> (i32, i32) {
    %c0_i32 = arith.constant 0 : i32
    %c0_i32_0 = arith.constant 0 : i32
    return %arg0, %c0_i32 : i32, i32
  }
  func.func @transform_1(%arg0: i32) -> (i32, i32) {
    %c0_i32 = arith.constant 0 : i32
    %c0_i32_0 = arith.constant 0 : i32
    %c0_i32_1 = arith.constant 0 : i32
    return %c0_i32, %c0_i32_0 : i32, i32
  }
  func.func @transform_2(%arg0: i32) -> (i32, i32) {
    %c0_i32 = arith.constant 0 : i32
    %c0_i32_0 = arith.constant 0 : i32
    %c0_i32_1 = arith.constant 0 : i32
    return %c0_i32, %c0_i32_0 : i32, i32
  }
  func.func @transform_3(%arg0: i32) -> (i32, i32) {
    %c0_i32 = arith.constant 0 : i32
    %c0_i32_0 = arith.constant 0 : i32
    %c0_i32_1 = arith.constant 0 : i32
    return %c0_i32, %c0_i32_0 : i32, i32
  }
  func.func @transform_4(%arg0: i32) -> (i32, i32) {
    %c0_i32 = arith.constant 0 : i32
    %c0_i32_0 = arith.constant 0 : i32
    %c0_i32_1 = arith.constant 0 : i32
    return %c0_i32, %c0_i32_0 : i32, i32
  }
  func.func @transform_5(%arg0: i32) -> (i32, i32) {
    %c0_i32 = arith.constant 0 : i32
    %c0_i32_0 = arith.constant 0 : i32
    return %arg0, %c0_i32 : i32, i32
  }
}

</mosaic_0001>

<llo_original>
// kernel: tpu_custom_call.1
$region0: #{tpu_custom_call.1}
  #allocation0 [shape = 'u32[]', space=smem, size = 0x4, offset = 0x4, fixed_abs, tag = 'smem constant byte address 0x4 - core index']
  #allocation1 [shape = 'u32[72,128]{1,0:T(1,128)}', space=vmem, size = 0x9000, scoped, tag = 'internal scratch']
  %s0 = inlined_call_operand.vmem [shape: f32[8,32], index: 0, kind: input, shape index: {}]
  %s1 = inlined_call_operand.vmem [shape: f32[32,32], index: 1, kind: input, shape index: {}]
  %s2 = inlined_call_operand.vmem [shape: f32[32,64], index: 2, kind: input, shape index: {}]
  %s3 = inlined_call_operand.vmem [shape: f32[64,16], index: 3, kind: input, shape index: {}]
  %s4 = inlined_call_operand.vmem [shape: f32[1,112], index: 4, kind: input, shape index: {}]
  %s5 = inlined_call_operand.hbm [shape: f32[8,16], index: 5, kind: output, shape index: {}]
  %s6 = sld [smem:[#allocation0]]
  $region30: #{tpu_custom_call.1} parent=0
    _
  %s8 = ssub.s32 1, %s6
  %s9 = scalar_select 0, %s8, %s6
  $region1: #{tpu_custom_call.1} parent=0
    #allocation2 [shape = 'u8[4096]{0}', space=vmem, size = 0x1000, scoped, tag = 'output window, operand 0, single buffered']
    #allocation3 [shape = 's32[1]{0}', space=sflag, size = 0x4, scoped, tag = 'scoped memory for tpu_custom_call.1']
    %10 = vsyncpa [#allocation3], 0
    // Predicated region
    $region2: #{tpu_custom_call.1} parent=1 // pred_check
      _
    $region3: #{tpu_custom_call.1} parent=1 // pred_check_branch
      %12 = sbr.rel (0) target = $region5
    $region4: #{tpu_custom_call.1} parent=1 // pred_region
      _
    $region5: #{tpu_custom_call.1} parent=1 // pred_fallthru
      _
    // Predicated region
    $region6: #{tpu_custom_call.1} parent=1 // pred_check
      _
    $region7: #{tpu_custom_call.1} parent=1 // pred_check_branch
      %14 = sbr.rel (0) target = $region9
    $region8: #{tpu_custom_call.1} parent=1 // pred_region
      _
    $region9: #{tpu_custom_call.1} parent=1 // pred_fallthru
      _
    // Predicated region
    $region10: #{tpu_custom_call.1} parent=1 // pred_check
      _
    $region11: #{tpu_custom_call.1} parent=1 // pred_check_branch
      %16 = sbr.rel (0) target = $region13
    $region12: #{tpu_custom_call.1} parent=1 // pred_region
      _
    $region13: #{tpu_custom_call.1} parent=1 // pred_fallthru
      _
    // Predicated region
    $region14: #{tpu_custom_call.1} parent=1 // pred_check
      _
    $region15: #{tpu_custom_call.1} parent=1 // pred_check_branch
      %18 = sbr.rel (0) target = $region17
    $region16: #{tpu_custom_call.1} parent=1 // pred_region
      _
    $region17: #{tpu_custom_call.1} parent=1 // pred_fallthru
      _
    // Predicated region
    $region18: #{tpu_custom_call.1} parent=1 // pred_check
      _
    $region19: #{tpu_custom_call.1} parent=1 // pred_check_branch
      %20 = sbr.rel (0) target = $region21
    $region20: #{tpu_custom_call.1} parent=1 // pred_region
      _
    $region21: #{tpu_custom_call.1} parent=1 // pred_fallthru
      _
    %v21 = vld [vmem:[%s0] sm:$0xff]
    %v22 = vld [vmem:[%s4] sm:$0x1]
    %v23 = vld [vmem:[%s1] sm:$0xff]
    %v24 = vld [vmem:[%s1 + $0x8] sm:$0xff]
    %v25 = vld [vmem:[%s1 + $0x10] sm:$0xff]
    %v26 = vld [vmem:[%s1 + $0x18] sm:$0xff]
    %v28 = vperm.slane %v22, 0
    %vm30 = vcmask 261120
    %v32 = vsel %vm30, %v21, 0
    %34 = vmatpush.msra.mxu0 0.0
    %35 = vmatpush.msra.mxu0 0.0
    %36 = vmatpush.msra.mxu0 0.0
    %37 = vmatpush.msra.mxu0 0.0
    %38 = vmatpush.msra.mxu0 0.0
    %39 = vmatpush.msra.mxu0 0.0
    %40 = vmatpush.msra.mxu0 0.0
    %41 = vmatpush.msra.mxu0 0.0
    %42 = vmatpush.msra.mxu0 0.0
    %43 = vmatpush.msra.mxu0 0.0
    %44 = vmatpush.msra.mxu0 0.0
    %45 = vmatpush.msra.mxu0 0.0
    %46 = vmatpush.msra.mxu0 %v26
    %47 = vmatpush.msra.mxu0 %v25
    %48 = vmatpush.msra.mxu0 %v24
    %49 = vmatpush.msra.mxu0 %v23
    %50 = vmatmul.f32.gmra.mxu0 %v32
    %v51 = vpop.f32.mrf.mxu0
    %v52 = vadd.f32 %v28, %v51
    %53 = vdwg.mxu0
    %v54 = vxor.u32 %v52, 2147483648
    %v55 = vmul.f32 %v54, 1.442695
    %v56 = vpow.pop %v55
    %v57 = vadd.f32 %v56, 1.0
    %v58 = vrcp.pop %v57
    %v59 = vmul.f32 %v57, %v58
    %v60 = vsub.f32 1.0, %v59
    %v61 = vmul.f32 %v58, %v60
    %v62 = vadd.f32 %v58, %v61
    %vm63 = vweird.f32 %v57
    %vm64 = vweird.f32 %v58
    %vm65 = vmor %vm63, %vm64
    %v66 = vsel %vm65, %v58, %v62
    %v67 = vand.u32 2147483647, %v57
    %vm68 = vcmp.eq.f32.partialorder %v67, 8.507059e+37
    %v69 = vand.u32 %v57, 2147483648
    %v70 = vor.u32 1.1754944e-38, %v69
    %v71 = vsel %vm68, %v70, %v66
    %v72 = vmul.f32 1.0, %v71
    %v73 = vmul.f32 %v52, %v72
    %v74 = vld [vmem:[%s2] sm:$0xff]
    %v75 = vld [vmem:[%s2 + $0x8] sm:$0xff]
    %v76 = vld [vmem:[%s2 + $0x10] sm:$0xff]
    %v77 = vld [vmem:[%s2 + $0x18] sm:$0xff]
    %78 = vrot.lane.b32.xlu0 %v28, 96
    %v79 = vpop.permute.xlu0 %78
    %v82 = vsel %vm30, %v73, 0
    %84 = vmatpush.msra.mxu0 0.0
    %85 = vmatpush.msra.mxu0 0.0
    %86 = vmatpush.msra.mxu0 0.0
    %87 = vmatpush.msra.mxu0 0.0
    %88 = vmatpush.msra.mxu0 0.0
    %89 = vmatpush.msra.mxu0 0.0
    %90 = vmatpush.msra.mxu0 0.0
    %91 = vmatpush.msra.mxu0 0.0
    %92 = vmatpush.msra.mxu0 0.0
    %93 = vmatpush.msra.mxu0 0.0
    %94 = vmatpush.msra.mxu0 0.0
    %95 = vmatpush.msra.mxu0 0.0
    %96 = vmatpush.msra.mxu0 %v77
    %97 = vmatpush.msra.mxu0 %v76
    %98 = vmatpush.msra.mxu0 %v75
    %99 = vmatpush.msra.mxu0 %v74
    %100 = vmatmul.f32.gmra.mxu0 %v82
    %v101 = vpop.f32.mrf.mxu0
    %v102 = vadd.f32 %v79, %v101
    %103 = vdwg.mxu0
    %v104 = vxor.u32 %v102, 2147483648
    %v105 = vmul.f32 %v104, 1.442695
    %v106 = vpow.pop %v105
    %v107 = vadd.f32 %v106, 1.0
    %v108 = vrcp.pop %v107
    %v109 = vmul.f32 %v107, %v108
    %v110 = vsub.f32 1.0, %v109
    %v111 = vmul.f32 %v108, %v110
    %v112 = vadd.f32 %v108, %v111
    %vm113 = vweird.f32 %v107
    %vm114 = vweird.f32 %v108
    %vm115 = vmor %vm113, %vm114
    %v116 = vsel %vm115, %v108, %v112
    %v117 = vand.u32 2147483647, %v107
    %vm118 = vcmp.eq.f32.partialorder %v117, 8.507059e+37
    %v119 = vand.u32 %v107, 2147483648
    %v120 = vor.u32 1.1754944e-38, %v119
    %v121 = vsel %vm118, %v120, %v116
    %v122 = vmul.f32 1.0, %v121
    %v123 = vmul.f32 %v102, %v122
    %v124 = vld [vmem:[%s3] sm:$0xff]
    %v125 = vld [vmem:[%s3 + $0x8] sm:$0xff]
    %v126 = vld [vmem:[%s3 + $0x10] sm:$0xff]
    %v127 = vld [vmem:[%s3 + $0x18] sm:$0xff]
    %v128 = vld [vmem:[%s3 + $0x20] sm:$0xff]
    %v129 = vld [vmem:[%s3 + $0x28] sm:$0xff]
    %v130 = vld [vmem:[%s3 + $0x30] sm:$0xff]
    %v131 = vld [vmem:[%s3 + $0x38] sm:$0xff]
    %132 = vrot.lane.b32.xlu0 %v28, 32
    %v133 = vpop.permute.xlu0 %132
    %vm135 = vcmask 523264
    %v137 = vsel %vm135, %v123, 0
    %139 = vmatpush.msra.mxu0 0.0
    %140 = vmatpush.msra.mxu0 0.0
    %141 = vmatpush.msra.mxu0 0.0
    %142 = vmatpush.msra.mxu0 0.0
    %143 = vmatpush.msra.mxu0 0.0
    %144 = vmatpush.msra.mxu0 0.0
    %145 = vmatpush.msra.mxu0 0.0
    %146 = vmatpush.msra.mxu0 0.0
    %147 = vmatpush.msra.mxu0 %v131
    %148 = vmatpush.msra.mxu0 %v130
    %149 = vmatpush.msra.mxu0 %v129
    %150 = vmatpush.msra.mxu0 %v128
    %151 = vmatpush.msra.mxu0 %v127
    %152 = vmatpush.msra.mxu0 %v126
    %153 = vmatpush.msra.mxu0 %v125
    %154 = vmatpush.msra.mxu0 %v124
    %155 = vmatmul.f32.gmra.mxu0 %v137
    %v156 = vpop.f32.mrf.mxu0
    %v157 = vadd.f32 %v133, %v156
    %158 = vdwg.mxu0
    %vm159 = vcmask 130048
    %160 = vst.msk [vmem:[#allocation2] sm:$0xff] %vm159, %v157
    // Predicated region
    $region22: #{tpu_custom_call.1} parent=1 // pred_check
      _
    $region23: #{tpu_custom_call.1} parent=1 // pred_check_branch
      %162 = sbr.rel (0) target = $region25
    $region24: #{tpu_custom_call.1} parent=1 // pred_region
      %164 = vsyncadd [#allocation3], 0
      %s166 = sshll.u32 [#allocation2], 4
      %s167 = int_to_ptr.vmem [resolvable:$true] %s166
      %s168 = sshll.u32 %s5, 4
      %s169 = int_to_ptr.hbm [resolvable:$true] %s168
      %171 = dma.vmem_to_hbm [thread:$0]  %s167, 128, %s169, [#allocation3]
    $region25: #{tpu_custom_call.1} parent=1 // pred_fallthru
      _
    // Predicated region
    $region26: #{tpu_custom_call.1} parent=1 // pred_check
      _
    $region27: #{tpu_custom_call.1} parent=1 // pred_check_branch
      %173 = sbr.rel (0) target = $region29
    $region28: #{tpu_custom_call.1} parent=1 // pred_region
      %175 = dma.done [#allocation3], 128
    $region29: #{tpu_custom_call.1} parent=1 // pred_fallthru
      _
    %176 = vsyncpa [#allocation3], 1

</llo_original>
